<compile_context>
chip_gen: v5e
topology: v5e:2x2
jax: 0.10.0
libtpu: 0.0.40
codegen_flags: <defaults>
</compile_context>

<pallas_src>
import jax
import jax.numpy as jnp
from jax.experimental import pallas as pl
from jax.experimental.pallas import tpu as pltpu


def _partial_sums_kernel(o_ref, t_ref, so_ref, soo_ref, st_ref, stt_ref):
    # o_ref / t_ref: (tR, tN) tiles of the row-major (B*C*T, H*W) slabs.
    # Outputs are per-row accumulators, resident across the reduction axis.
    k = pl.program_id(1)

    @pl.when(k == 0)
    def _():
        so_ref[...] = jnp.zeros_like(so_ref)
        soo_ref[...] = jnp.zeros_like(soo_ref)
        st_ref[...] = jnp.zeros_like(st_ref)
        stt_ref[...] = jnp.zeros_like(stt_ref)

    o = o_ref[...].astype(jnp.float32)
    t = t_ref[...].astype(jnp.float32)

    so_ref[...] += jnp.sum(o, axis=1, keepdims=True)
    soo_ref[...] += jnp.sum(o * o, axis=1, keepdims=True)
    st_ref[...] += jnp.sum(t, axis=1, keepdims=True)
    stt_ref[...] += jnp.sum(t * t, axis=1, keepdims=True)


def _pick_tile(dim, unit, cap):
    """Largest multiple of `unit` that divides `dim` and is <= cap.

    `dim` is assumed to already be a multiple of `unit`; if dim <= cap the full
    extent is used (always legal as a block dim).
    """
    if dim <= cap:
        return dim
    best = unit
    for t in range(unit, cap + 1, unit):
        if dim % t == 0:
            best = t
    return best


def brightness_contrast_loss(outputs, targets, weights=None):
    """outputs, targets: (B, C, T, H, W) arrays. Returns scalar f32 loss."""
    del weights  # unused in the reference module as well
    B, C, T, H, W = outputs.shape
    R, N = B * C * T, H * W
    n_red = C * H * W  # reduction size per (b, t) in the reference

    # Free reshape (no data movement): one row per (b, c, t).
    o2 = outputs.reshape(R, N)
    t2 = targets.reshape(R, N)

    # Pad to TPU-friendly multiples only when needed (zeros are neutral for
    # sum / sum-of-squares; padded rows are dropped in the epilogue).
    r_pad = (-R) % 8
    n_pad = (-N) % 128
    if r_pad or n_pad:
        o2 = jnp.pad(o2, ((0, r_pad), (0, n_pad)))
        t2 = jnp.pad(t2, ((0, r_pad), (0, n_pad)))
    Rp, Np = R + r_pad, N + n_pad

    # Tile sizes: keep 2 inputs x 2 pipeline buffers <= ~8 MiB so the kernel
    # fits every generation's default scoped VMEM budget with headroom.
    itemsize = jnp.dtype(outputs.dtype).itemsize
    tr = _pick_tile(Rp, 8, 256)
    tn_cap = max(128, ((8 * 1024 * 1024) // (4 * tr * itemsize)) // 128 * 128)
    tn = _pick_tile(Np, 128, tn_cap)

    out_shape = [jax.ShapeDtypeStruct((Rp, 1), jnp.float32)] * 4
    row_spec = pl.BlockSpec((tr, 1), lambda i, k: (i, 0))
    in_spec = pl.BlockSpec((tr, tn), lambda i, k: (i, k))

    so, soo, st, stt = pl.pallas_call(
        _partial_sums_kernel,
        out_shape=out_shape,
        grid_spec=pltpu.PrefetchScalarGridSpec(
            num_scalar_prefetch=0,
            grid=(Rp // tr, Np // tn),
            in_specs=[in_spec, in_spec],
            out_specs=[row_spec, row_spec, row_spec, row_spec],
        ),
        compiler_params=pltpu.CompilerParams(
            dimension_semantics=("parallel", "arbitrary"),
            vmem_limit_bytes=32 * 1024 * 1024,
        ),
    )(o2, t2)

    # Tiny epilogue on B*C*T scalars: fold the C axis, then mean / unbiased std
    # and the two MSE terms (as recommended by the perf review).
    def fold(x):
        return x[:R, 0].reshape(B, C, T).sum(axis=1)  # (B, T)

    sum_o, sumsq_o, sum_t, sumsq_t = fold(so), fold(soo), fold(st), fold(stt)

    inv_n = 1.0 / n_red
    mean_o = sum_o * inv_n
    mean_t = sum_t * inv_n
    # Unbiased (correction=1) variance from single-pass sums, clamped at 0.
    inv_nm1 = 1.0 / (n_red - 1)
    var_o = jnp.maximum(sumsq_o - sum_o * mean_o, 0.0) * inv_nm1
    var_t = jnp.maximum(sumsq_t - sum_t * mean_t, 0.0) * inv_nm1

    brightness_loss = jnp.mean((mean_o - mean_t) ** 2)
    contrast_loss = jnp.mean((jnp.sqrt(var_o) - jnp.sqrt(var_t)) ** 2)
    return brightness_loss + contrast_loss


def _reference(outputs, targets):
    o = jnp.transpose(outputs, (0, 2, 1, 3, 4)).astype(jnp.float32)
    t = jnp.transpose(targets, (0, 2, 1, 3, 4)).astype(jnp.float32)
    bo = o.mean(axis=(2, 3, 4))
    bt = t.mean(axis=(2, 3, 4))
    co = jnp.std(o, axis=(2, 3, 4), ddof=1)
    ct = jnp.std(t, axis=(2, 3, 4), ddof=1)
    return jnp.mean((bo - bt) ** 2) + jnp.mean((co - ct) ** 2)


if __name__ == "__main__":
    key = jax.random.PRNGKey(0)
    k1, k2 = jax.random.split(key)
    B, C, T, H, W = 2, 4, 2, 16, 16
    outputs = jax.random.normal(k1, (B, C, T, H, W), dtype=jnp.float32)
    targets = jax.random.normal(k2, (B, C, T, H, W), dtype=jnp.float32)

    loss = jax.jit(brightness_contrast_loss)(outputs, targets)
    jax.block_until_ready(loss)

    ref = _reference(outputs, targets)
    assert jnp.allclose(loss, ref, rtol=1e-4, atol=1e-5), (loss, ref)
    print("KERNEL_OK")
</pallas_src>

<mosaic_0001>
module attributes {stable_mosaic.version = 11 : i64} {
  func.func @_partial_sums_kernel(%arg0: i32, %arg1: i32, %arg2: memref<16x256xf32, #tpu.memory_space<vmem>>, %arg3: memref<16x256xf32, #tpu.memory_space<vmem>>, %arg4: memref<16x1xf32, #tpu.memory_space<vmem>>, %arg5: memref<16x1xf32, #tpu.memory_space<vmem>>, %arg6: memref<16x1xf32, #tpu.memory_space<vmem>>, %arg7: memref<16x1xf32, #tpu.memory_space<vmem>>) attributes {dimension_semantics = [#tpu.dimension_semantics<parallel>, #tpu.dimension_semantics<arbitrary>], iteration_bounds = array<i64: 1, 1>, scalar_prefetch = 0 : i64, scratch_operands = 0 : i64, tpu.core_type = #tpu.core_type<tc>, window_params = [{transform_indices = @transform_0, window_bounds = array<i64: 16, 256>}, {transform_indices = @transform_1, window_bounds = array<i64: 16, 256>}, {transform_indices = @transform_2, window_bounds = array<i64: 16, 1>}, {transform_indices = @transform_3, window_bounds = array<i64: 16, 1>}, {transform_indices = @transform_4, window_bounds = array<i64: 16, 1>}, {transform_indices = @transform_5, window_bounds = array<i64: 16, 1>}]} {
    %c0_i32 = arith.constant 0 : i32
    %0 = arith.cmpi eq, %arg1, %c0_i32 : i32
    %1 = arith.extui %0 : i1 to i32
    %c0_i32_0 = arith.constant 0 : i32
    %2 = arith.cmpi ne, %1, %c0_i32_0 : i32
    scf.if %2 {
      %cst_23 = arith.constant 0.000000e+00 : f32
      %27 = vector.broadcast %cst_23 : f32 to vector<16x1xf32>
      %c0_24 = arith.constant 0 : index
      %c0_25 = arith.constant 0 : index
      %28 = vector.load %arg4[%c0_24, %c0_25] : memref<16x1xf32, #tpu.memory_space<vmem>>, vector<16x1xf32>
      tpu.vector_store %arg4[%c0_24, %c0_25], %27 {strides = array<i32>} : memref<16x1xf32, #tpu.memory_space<vmem>>, vector<16x1xf32>,
      %cst_26 = arith.constant 0.000000e+00 : f32
      %29 = vector.broadcast %cst_26 : f32 to vector<16x1xf32>
      %c0_27 = arith.constant 0 : index
      %c0_28 = arith.constant 0 : index
      %30 = vector.load %arg5[%c0_27, %c0_28] : memref<16x1xf32, #tpu.memory_space<vmem>>, vector<16x1xf32>
      tpu.vector_store %arg5[%c0_27, %c0_28], %29 {strides = array<i32>} : memref<16x1xf32, #tpu.memory_space<vmem>>, vector<16x1xf32>,
      %cst_29 = arith.constant 0.000000e+00 : f32
      %31 = vector.broadcast %cst_29 : f32 to vector<16x1xf32>
      %c0_30 = arith.constant 0 : index
      %c0_31 = arith.constant 0 : index
      %32 = vector.load %arg6[%c0_30, %c0_31] : memref<16x1xf32, #tpu.memory_space<vmem>>, vector<16x1xf32>
      tpu.vector_store %arg6[%c0_30, %c0_31], %31 {strides = array<i32>} : memref<16x1xf32, #tpu.memory_space<vmem>>, vector<16x1xf32>,
      %cst_32 = arith.constant 0.000000e+00 : f32
      %33 = vector.broadcast %cst_32 : f32 to vector<16x1xf32>
      %c0_33 = arith.constant 0 : index
      %c0_34 = arith.constant 0 : index
      %34 = vector.load %arg7[%c0_33, %c0_34] : memref<16x1xf32, #tpu.memory_space<vmem>>, vector<16x1xf32>
      tpu.vector_store %arg7[%c0_33, %c0_34], %33 {strides = array<i32>} : memref<16x1xf32, #tpu.memory_space<vmem>>, vector<16x1xf32>,
    } else {
    }
    %c0 = arith.constant 0 : index
    %c0_1 = arith.constant 0 : index
    %3 = vector.load %arg2[%c0, %c0_1] : memref<16x256xf32, #tpu.memory_space<vmem>>, vector<16x256xf32>
    %c0_2 = arith.constant 0 : index
    %c0_3 = arith.constant 0 : index
    %4 = vector.load %arg3[%c0_2, %c0_3] : memref<16x256xf32, #tpu.memory_space<vmem>>, vector<16x256xf32>
    %c0_4 = arith.constant 0 : index
    %c0_5 = arith.constant 0 : index
    %5 = vector.load %arg4[%c0_4, %c0_5] : memref<16x1xf32, #tpu.memory_space<vmem>>, vector<16x1xf32>
    %cst = arith.constant dense<0.000000e+00> : vector<16xf32>
    %6 = vector.multi_reduction <add>, %3, %cst [1] : vector<16x256xf32> to vector<16xf32>
    %7 = vector.shape_cast %6 : vector<16xf32> to vector<16x1xf32>
    %8 = arith.addf %5, %7 : vector<16x1xf32>
    %c0_6 = arith.constant 0 : index
    %c0_7 = arith.constant 0 : index
    %9 = vector.load %arg4[%c0_6, %c0_7] : memref<16x1xf32, #tpu.memory_space<vmem>>, vector<16x1xf32>
    tpu.vector_store %arg4[%c0_6, %c0_7], %8 {strides = array<i32>} : memref<16x1xf32, #tpu.memory_space<vmem>>, vector<16x1xf32>,
    %c0_8 = arith.constant 0 : index
    %c0_9 = arith.constant 0 : index
    %10 = vector.load %arg5[%c0_8, %c0_9] : memref<16x1xf32, #tpu.memory_space<vmem>>, vector<16x1xf32>
    %11 = arith.mulf %3, %3 : vector<16x256xf32>
    %cst_10 = arith.constant dense<0.000000e+00> : vector<16xf32>
    %12 = vector.multi_reduction <add>, %11, %cst_10 [1] : vector<16x256xf32> to vector<16xf32>
    %13 = vector.shape_cast %12 : vector<16xf32> to vector<16x1xf32>
    %14 = arith.addf %10, %13 : vector<16x1xf32>
    %c0_11 = arith.constant 0 : index
    %c0_12 = arith.constant 0 : index
    %15 = vector.load %arg5[%c0_11, %c0_12] : memref<16x1xf32, #tpu.memory_space<vmem>>, vector<16x1xf32>
    tpu.vector_store %arg5[%c0_11, %c0_12], %14 {strides = array<i32>} : memref<16x1xf32, #tpu.memory_space<vmem>>, vector<16x1xf32>,
    %c0_13 = arith.constant 0 : index
    %c0_14 = arith.constant 0 : index
    %16 = vector.load %arg6[%c0_13, %c0_14] : memref<16x1xf32, #tpu.memory_space<vmem>>, vector<16x1xf32>
    %cst_15 = arith.constant dense<0.000000e+00> : vector<16xf32>
    %17 = vector.multi_reduction <add>, %4, %cst_15 [1] : vector<16x256xf32> to vector<16xf32>
    %18 = vector.shape_cast %17 : vector<16xf32> to vector<16x1xf32>
    %19 = arith.addf %16, %18 : vector<16x1xf32>
    %c0_16 = arith.constant 0 : index
    %c0_17 = arith.constant 0 : index
    %20 = vector.load %arg6[%c0_16, %c0_17] : memref<16x1xf32, #tpu.memory_space<vmem>>, vector<16x1xf32>
    tpu.vector_store %arg6[%c0_16, %c0_17], %19 {strides = array<i32>} : memref<16x1xf32, #tpu.memory_space<vmem>>, vector<16x1xf32>,
    %c0_18 = arith.constant 0 : index
    %c0_19 = arith.constant 0 : index
    %21 = vector.load %arg7[%c0_18, %c0_19] : memref<16x1xf32, #tpu.memory_space<vmem>>, vector<16x1xf32>
    %22 = arith.mulf %4, %4 : vector<16x256xf32>
    %cst_20 = arith.constant dense<0.000000e+00> : vector<16xf32>
    %23 = vector.multi_reduction <add>, %22, %cst_20 [1] : vector<16x256xf32> to vector<16xf32>
    %24 = vector.shape_cast %23 : vector<16xf32> to vector<16x1xf32>
    %25 = arith.addf %21, %24 : vector<16x1xf32>
    %c0_21 = arith.constant 0 : index
    %c0_22 = arith.constant 0 : index
    %26 = vector.load %arg7[%c0_21, %c0_22] : memref<16x1xf32, #tpu.memory_space<vmem>>, vector<16x1xf32>
    tpu.vector_store %arg7[%c0_21, %c0_22], %25 {strides = array<i32>} : memref<16x1xf32, #tpu.memory_space<vmem>>, vector<16x1xf32>,
    return
  }
  func.func @transform_0(%arg0: i32, %arg1: i32) -> (i32, i32) {
    %c0_i32 = arith.constant 0 : i32
    return %arg0, %arg1 : i32, i32
  }
  func.func @transform_1(%arg0: i32, %arg1: i32) -> (i32, i32) {
    %c0_i32 = arith.constant 0 : i32
    return %arg0, %arg1 : i32, i32
  }
  func.func @transform_2(%arg0: i32, %arg1: i32) -> (i32, i32) {
    %c0_i32 = arith.constant 0 : i32
    %c0_i32_0 = arith.constant 0 : i32
    return %arg0, %c0_i32 : i32, i32
  }
  func.func @transform_3(%arg0: i32, %arg1: i32) -> (i32, i32) {
    %c0_i32 = arith.constant 0 : i32
    %c0_i32_0 = arith.constant 0 : i32
    return %arg0, %c0_i32 : i32, i32
  }
  func.func @transform_4(%arg0: i32, %arg1: i32) -> (i32, i32) {
    %c0_i32 = arith.constant 0 : i32
    %c0_i32_0 = arith.constant 0 : i32
    return %arg0, %c0_i32 : i32, i32
  }
  func.func @transform_5(%arg0: i32, %arg1: i32) -> (i32, i32) {
    %c0_i32 = arith.constant 0 : i32
    %c0_i32_0 = arith.constant 0 : i32
    return %arg0, %c0_i32 : i32, i32
  }
}

</mosaic_0001>

<llo_original>
// kernel: squeeze.7
$region0: #{squeeze.7}
  %s0 = inlined_call_operand.vmem [shape: f32[16], index: 0, kind: input, shape index: {}]
  %s1 = inlined_call_operand.vmem [shape: f32[2,4,2], index: 1, kind: output, shape index: {}]
  $region1: #{squeeze.7} parent=0
    #allocation0 [shape = 'u8[8192]{0}', space=vmem, size = 0x2000, scoped, tag = 'scoped mem for output reshape']
    #allocation1 [shape = 'u8[4096]{0}', space=vmem, size = 0x1000, scoped, tag = 'scoped mem for input reshape']
    %s3 = ssub.s32 2, 1
    %v4 = vld [vmem:[%s0] sm:%s3]
    %5 = vst [vmem:[#allocation1] sm:%s3] %v4
    %v6 = vld [vmem:[#allocation1] sm:$0x1]
    %vm7 = vcmask 15360
    %8 = vst.msk [vmem:[#allocation0] sm:$0x1] %vm7, %v6
    %v9 = vld [vmem:[#allocation1] sm:$0x1]
    %10 = vrot.lane.b32.xlu0 %v9, 126
    %v11 = vpop.permute.xlu0 %10
    %vm12 = vcmask 15360
    %s13 = scalar_lea.vmem [#allocation0], 1
    %14 = vst.msk [vmem:[%s13] sm:$0x1] %vm12, %v11
    %v15 = vld [vmem:[#allocation1] sm:$0x1]
    %16 = vrot.lane.b32.xlu0 %v15, 124
    %v17 = vpop.permute.xlu0 %16
    %vm18 = vcmask 15360
    %s19 = scalar_lea.vmem [#allocation0], 2
    %20 = vst.msk [vmem:[%s19] sm:$0x1] %vm18, %v17
    %v21 = vld [vmem:[#allocation1] sm:$0x1]
    %22 = vrot.lane.b32.xlu0 %v21, 122
    %v23 = vpop.permute.xlu0 %22
    %vm24 = vcmask 15360
    %s25 = scalar_lea.vmem [#allocation0], 3
    %26 = vst.msk [vmem:[%s25] sm:$0x1] %vm24, %v23
    %v27 = vld [vmem:[#allocation1] sm:$0x1]
    %28 = vrot.lane.b32.xlu0 %v27, 120
    %v29 = vpop.permute.xlu0 %28
    %vm30 = vcmask 15360
    %s31 = scalar_lea.vmem [#allocation0], 8
    %32 = vst.msk [vmem:[%s31] sm:$0x1] %vm30, %v29
    %v33 = vld [vmem:[#allocation1] sm:$0x1]
    %34 = vrot.lane.b32.xlu0 %v33, 118
    %v35 = vpop.permute.xlu0 %34
    %vm36 = vcmask 15360
    %s37 = scalar_lea.vmem [#allocation0], 9
    %38 = vst.msk [vmem:[%s37] sm:$0x1] %vm36, %v35
    %v39 = vld [vmem:[#allocation1] sm:$0x1]
    %40 = vrot.lane.b32.xlu0 %v39, 116
    %v41 = vpop.permute.xlu0 %40
    %vm42 = vcmask 15360
    %s43 = scalar_lea.vmem [#allocation0], 10
    %44 = vst.msk [vmem:[%s43] sm:$0x1] %vm42, %v41
    %v45 = vld [vmem:[#allocation1] sm:$0x1]
    %46 = vrot.lane.b32.xlu0 %v45, 114
    %v47 = vpop.permute.xlu0 %46
    %vm48 = vcmask 15360
    %s49 = scalar_lea.vmem [#allocation0], 11
    %50 = vst.msk [vmem:[%s49] sm:$0x1] %vm48, %v47
    %s52 = ssub.s32 16, 1
    %v53 = vld [vmem:[#allocation0] sm:%s52]
    %s55 = ssub.s32 16, 1
    %56 = vst [vmem:[%s1] sm:%s55] %v53
    %s57 = scalar_lea.vmem [#allocation0], 8
    %v58 = vld [vmem:[%s57] sm:%s52]
    %s60 = ssub.s32 16, 1
    %s61 = scalar_lea.vmem %s1, 4
    %62 = vst [vmem:[%s61] sm:%s60] %v58

// kernel: brightness_contrast_loss.1
$region0: #{brightness_contrast_loss.1}
  #allocation0 [shape = 'u32[]', space=smem, size = 0x4, offset = 0x4, fixed_abs, tag = 'smem constant byte address 0x4 - core index']
  #allocation1 [shape = 'u32[72,128]{1,0:T(1,128)}', space=vmem, size = 0x9000, scoped, tag = 'internal scratch']
  %s0 = inlined_call_operand.vmem [shape: f32[16,256], index: 0, kind: input, shape index: {}]
  %s1 = inlined_call_operand.vmem [shape: f32[16,256], index: 1, kind: input, shape index: {}]
  %s2 = inlined_call_operand.vmem [shape: f32[16,1], index: 2, kind: output, shape index: {0}]
  %s3 = inlined_call_operand.vmem [shape: f32[16,1], index: 3, kind: output, shape index: {1}]
  %s4 = inlined_call_operand.vmem [shape: f32[16,1], index: 4, kind: output, shape index: {2}]
  %s5 = inlined_call_operand.vmem [shape: f32[16,1], index: 5, kind: output, shape index: {3}]
  %6 = xla_tuple %s2, %s3, %s4, %s5
  %s7 = sld [smem:[#allocation0]]
  $region46: #{brightness_contrast_loss.1} parent=0
    _
  %s9 = ssub.s32 1, %s7
  %s10 = scalar_select 0, %s9, %s7
  // Predicated region
  $region2: #{brightness_contrast_loss.1} parent=0 // pred_check
    _
  $region3: #{brightness_contrast_loss.1} parent=0 // pred_check_branch
    %12 = sbr.rel (0) target = $region5
  $region4: #{brightness_contrast_loss.1} parent=0 // pred_region
    _
  $region5: #{brightness_contrast_loss.1} parent=0 // pred_fallthru
    _
  // Predicated region
  $region6: #{brightness_contrast_loss.1} parent=0 // pred_check
    _
  $region7: #{brightness_contrast_loss.1} parent=0 // pred_check_branch
    %14 = sbr.rel (0) target = $region9
  $region8: #{brightness_contrast_loss.1} parent=0 // pred_region
    _
  $region9: #{brightness_contrast_loss.1} parent=0 // pred_fallthru
    _
  %p15 = scmp.eq.s32.totalorder 0, 0
  // Predicated region
  $region10: #{brightness_contrast_loss.1} parent=0 // pred_check
    %p16 = pneg %p15
  $region11: #{brightness_contrast_loss.1} parent=0 // pred_check_branch
    %18 = sbr.rel (%p16) target = $region13
  $region12: #{brightness_contrast_loss.1} parent=0 // pred_region
    %vm19 = vcmask 7168
    %20 = vst.msk [vmem:[%s2] sm:$0xff] %vm19, 0.0
    %21 = vst.msk [vmem:[%s2 + $0x8] sm:$0xff] %vm19, 0.0
    %22 = vst.msk [vmem:[%s3] sm:$0xff] %vm19, 0.0
    %23 = vst.msk [vmem:[%s3 + $0x8] sm:$0xff] %vm19, 0.0
    %24 = vst.msk [vmem:[%s4] sm:$0xff] %vm19, 0.0
    %25 = vst.msk [vmem:[%s4 + $0x8] sm:$0xff] %vm19, 0.0
    %26 = vst.msk [vmem:[%s5] sm:$0xff] %vm19, 0.0
    %27 = vst.msk [vmem:[%s5 + $0x8] sm:$0xff] %vm19, 0.0
  $region13: #{brightness_contrast_loss.1} parent=0 // pred_fallthru
    _
  %v28 = vld [vmem:[%s0] sm:$0xff]
  %v29 = vld [vmem:[%s0 + $0x8] sm:$0xff]
  %v30 = vld [vmem:[%s0 + $0x10] sm:$0xff]
  %v31 = vld [vmem:[%s0 + $0x18] sm:$0xff]
  %v32 = vld [vmem:[%s1] sm:$0xff]
  %v33 = vld [vmem:[%s1 + $0x8] sm:$0xff]
  %v34 = vld [vmem:[%s1 + $0x10] sm:$0xff]
  %v35 = vld [vmem:[%s1 + $0x18] sm:$0xff]
  %v36 = vld [vmem:[%s2] sm:$0xff]
  %v37 = vld [vmem:[%s2 + $0x8] sm:$0xff]
  %v38 = vadd.f32 %v28, %v29
  %39 = vadd.xlane.f32.xlu0 %v38
  %v40 = vpop.xlane.xlu0 %39
  %v41 = vadd.f32 %v30, %v31
  %42 = vadd.xlane.f32.xlu0 %v41
  %v43 = vpop.xlane.xlu0 %42
  %v44 = vadd.f32 %v36, %v40
  %v45 = vadd.f32 %v37, %v43
  %vm46 = vcmask 7168
  %47 = vst.msk [vmem:[%s2] sm:$0xff] %vm46, %v44
  %48 = vst.msk [vmem:[%s2 + $0x8] sm:$0xff] %vm46, %v45
  %v49 = vld [vmem:[%s3] sm:$0xff]
  %v50 = vld [vmem:[%s3 + $0x8] sm:$0xff]
  %v51 = vmul.f32 %v28, %v28
  %v52 = vmul.f32 %v29, %v29
  %v53 = vmul.f32 %v30, %v30
  %v54 = vmul.f32 %v31, %v31
  %v55 = vadd.f32 %v51, %v52
  %56 = vadd.xlane.f32.xlu0 %v55
  %v57 = vpop.xlane.xlu0 %56
  %v58 = vadd.f32 %v53, %v54
  %59 = vadd.xlane.f32.xlu0 %v58
  %v60 = vpop.xlane.xlu0 %59
  %v61 = vadd.f32 %v49, %v57
  %v62 = vadd.f32 %v50, %v60
  %63 = vst.msk [vmem:[%s3] sm:$0xff] %vm46, %v61
  %64 = vst.msk [vmem:[%s3 + $0x8] sm:$0xff] %vm46, %v62
  %v65 = vld [vmem:[%s4] sm:$0xff]
  %v66 = vld [vmem:[%s4 + $0x8] sm:$0xff]
  %v67 = vadd.f32 %v32, %v33
  %68 = vadd.xlane.f32.xlu0 %v67
  %v69 = vpop.xlane.xlu0 %68
  %v70 = vadd.f32 %v34, %v35
  %71 = vadd.xlane.f32.xlu0 %v70
  %v72 = vpop.xlane.xlu0 %71
  %v73 = vadd.f32 %v65, %v69
  %v74 = vadd.f32 %v66, %v72
  %75 = vst.msk [vmem:[%s4] sm:$0xff] %vm46, %v73
  %76 = vst.msk [vmem:[%s4 + $0x8] sm:$0xff] %vm46, %v74
  %v77 = vld [vmem:[%s5] sm:$0xff]
  %v78 = vld [vmem:[%s5 + $0x8] sm:$0xff]
  %v79 = vmul.f32 %v32, %v32
  %v80 = vmul.f32 %v33, %v33
  %v81 = vmul.f32 %v34, %v34
  %v82 = vmul.f32 %v35, %v35
  %v83 = vadd.f32 %v79, %v80
  %84 = vadd.xlane.f32.xlu0 %v83
  %v85 = vpop.xlane.xlu0 %84
  %v86 = vadd.f32 %v81, %v82
  %87 = vadd.xlane.f32.xlu0 %v86
  %v88 = vpop.xlane.xlu0 %87
  %v89 = vadd.f32 %v77, %v85
  %v90 = vadd.f32 %v78, %v88
  %91 = vst.msk [vmem:[%s5] sm:$0xff] %vm46, %v89
  %92 = vst.msk [vmem:[%s5 + $0x8] sm:$0xff] %vm46, %v90
  // Predicated region
  $region14: #{brightness_contrast_loss.1} parent=0 // pred_check
    _
  $region15: #{brightness_contrast_loss.1} parent=0 // pred_check_branch
    %94 = sbr.rel (0) target = $region17
  $region16: #{brightness_contrast_loss.1} parent=0 // pred_region
    _
  $region17: #{brightness_contrast_loss.1} parent=0 // pred_fallthru
    _
  // Predicated region
  $region18: #{brightness_contrast_loss.1} parent=0 // pred_check
    _
  $region19: #{brightness_contrast_loss.1} parent=0 // pred_check_branch
    %96 = sbr.rel (0) target = $region21
  $region20: #{brightness_contrast_loss.1} parent=0 // pred_region
    _
  $region21: #{brightness_contrast_loss.1} parent=0 // pred_fallthru
    _
  // Predicated region
  $region22: #{brightness_contrast_loss.1} parent=0 // pred_check
    _
  $region23: #{brightness_contrast_loss.1} parent=0 // pred_check_branch
    %98 = sbr.rel (0) target = $region25
  $region24: #{brightness_contrast_loss.1} parent=0 // pred_region
    _
  $region25: #{brightness_contrast_loss.1} parent=0 // pred_fallthru
    _
  // Predicated region
  $region26: #{brightness_contrast_loss.1} parent=0 // pred_check
    _
  $region27: #{brightness_contrast_loss.1} parent=0 // pred_check_branch
    %100 = sbr.rel (0) target = $region29
  $region28: #{brightness_contrast_loss.1} parent=0 // pred_region
    _
  $region29: #{brightness_contrast_loss.1} parent=0 // pred_fallthru
    _
  // Predicated region
  $region30: #{brightness_contrast_loss.1} parent=0 // pred_check
    _
  $region31: #{brightness_contrast_loss.1} parent=0 // pred_check_branch
    %102 = sbr.rel (0) target = $region33
  $region32: #{brightness_contrast_loss.1} parent=0 // pred_region
    _
  $region33: #{brightness_contrast_loss.1} parent=0 // pred_fallthru
    _
  // Predicated region
  $region34: #{brightness_contrast_loss.1} parent=0 // pred_check
    _
  $region35: #{brightness_contrast_loss.1} parent=0 // pred_check_branch
    %104 = sbr.rel (0) target = $region37
  $region36: #{brightness_contrast_loss.1} parent=0 // pred_region
    _
  $region37: #{brightness_contrast_loss.1} parent=0 // pred_fallthru
    _
  // Predicated region
  $region38: #{brightness_contrast_loss.1} parent=0 // pred_check
    _
  $region39: #{brightness_contrast_loss.1} parent=0 // pred_check_branch
    %106 = sbr.rel (0) target = $region41
  $region40: #{brightness_contrast_loss.1} parent=0 // pred_region
    _
  $region41: #{brightness_contrast_loss.1} parent=0 // pred_fallthru
    _
  // Predicated region
  $region42: #{brightness_contrast_loss.1} parent=0 // pred_check
    _
  $region43: #{brightness_contrast_loss.1} parent=0 // pred_check_branch
    %108 = sbr.rel (0) target = $region45
  $region44: #{brightness_contrast_loss.1} parent=0 // pred_region
    _
  $region45: #{brightness_contrast_loss.1} parent=0 // pred_fallthru
    _

</llo_original>
